<compile_context>
chip_gen: v7x
topology: tpu7x:2x2x1
jax: 0.10.0
libtpu: 0.0.40
codegen_flags: <defaults>
</compile_context>

<pallas_src>
import math

import jax
import jax.numpy as jnp
from jax.experimental import pallas as pl
from jax.experimental.pallas import tpu as pltpu

TWO_PI = 2.0 * math.pi
LANE = 128


def _circular_flow_kernel(params_ref, x_ref, out_ref):
    # params_ref (SMEM, (6,) f32):
    #   [omega_x, omega_y, 1-|omega|^2, log(1-|omega|^2), cos(theta), sin(theta)]
    wx = params_ref[0]
    wy = params_ref[1]
    one_minus_w2 = params_ref[2]
    log_one_minus_w2 = params_ref[3]
    cos_t = params_ref[4]
    sin_t = params_ref[5]

    x0 = x_ref[0]  # (block_rows, 128)
    x1 = x_ref[1]  # (block_rows, 128)

    # Moebius transform h_w(x) on the unit circle.
    d0 = x0 - wx
    d1 = x1 - wy
    denom = d0 * d0 + d1 * d1            # |x - w|^2 >= (1 - |w|)^2 > 0
    scale = one_minus_w2 / denom         # dphi'/dphi > 0 (exact divide; compute has slack)
    h0 = scale * d0 - wx
    h1 = scale * d1 - wy

    # as_vector(mod_2pi(phi' + theta)) == rotate h by theta.
    out_ref[0] = cos_t * h0 - sin_t * h1
    out_ref[1] = sin_t * h0 + cos_t * h1

    # ldj = log(dydx) = log(1-|w|^2) - log(|x-w|^2)
    out_ref[2] = log_one_minus_w2 - jnp.log(denom)


def circular_flow_forward(x, rotation, omega, *, block_rows=2048):
    """CircularFlow forward in component-major layout.

    x:        (2, N) f32 — component-major unit vectors (row 0 = x[:,0], row 1 = x[:,1]
              of the PyTorch (N, 2) input).  Keeping this layout end-to-end avoids any
              transpose / interleave copies around the kernel.
    rotation: (1,) f32 learned rotation angle theta.
    omega:    (2,) f32 Moebius parameter, |omega| < 1.

    Returns (y (2, N), ldj (N,)).
    """
    x = jnp.asarray(x, jnp.float32)
    n = x.shape[1]
    n_pad = ((n + LANE - 1) // LANE) * LANE
    if n_pad != n:
        # Fallback (copies): pad with a safe unit vector so dead lanes stay finite.
        # Fast path (no copies) requires n % 128 == 0.
        pad = n_pad - n
        x = jnp.stack(
            [
                jnp.concatenate([x[0], jnp.ones((pad,), jnp.float32)]),
                jnp.concatenate([x[1], jnp.zeros((pad,), jnp.float32)]),
            ]
        )
    m = n_pad // LANE
    x_slab = x.reshape(2, m, LANE)  # contiguous reshape — free

    theta = rotation[0]
    one_minus_w2 = 1.0 - (omega[0] * omega[0] + omega[1] * omega[1])
    params = jnp.stack(
        [
            omega[0],
            omega[1],
            one_minus_w2,
            jnp.log(one_minus_w2),
            jnp.cos(theta),
            jnp.sin(theta),
        ]
    ).astype(jnp.float32)

    # Block sizing: (2, br, 128) f32 input (~1 MiB/1024 rows) + (3, br, 128) output.
    br = min(block_rows, m)
    if br != m:
        br = max(8, (br // 8) * 8)  # block rows must be a multiple of 8 (or == m)
    if m >= 16:
        # Keep >= 2 grid steps so the "parallel" batch axis can shard across
        # v7x's two TensorCores (harmless on single-TC v5e/v6e).
        br = min(br, max(8, ((m // 2) // 8) * 8))
    grid = (pl.cdiv(m, br),)

    in_spec = pl.BlockSpec((2, br, LANE), lambda i, params: (0, i, 0))
    out_spec = pl.BlockSpec((3, br, LANE), lambda i, params: (0, i, 0))

    n_elem = m * LANE
    out = pl.pallas_call(
        _circular_flow_kernel,
        out_shape=jax.ShapeDtypeStruct((3, m, LANE), jnp.float32),
        grid_spec=pltpu.PrefetchScalarGridSpec(
            num_scalar_prefetch=1,
            grid=grid,
            in_specs=[in_spec],
            out_specs=out_spec,
        ),
        compiler_params=pltpu.CompilerParams(
            dimension_semantics=("parallel",),
            # Double-buffered 2 MiB in + 3 MiB out blocks = 10 MiB; raise the
            # scoped-VMEM limit so larger block_rows also fit on v5e (16 MiB default).
            vmem_limit_bytes=32 * 1024 * 1024,
        ),
        cost_estimate=pl.CostEstimate(
            flops=16 * n_elem,
            transcendentals=2 * n_elem,
            bytes_accessed=20 * n_elem,
        ),
    )(params, x_slab)

    # When n % 128 == 0 these slices are identity (no HBM copies).
    y = out[:2].reshape(2, n_pad)[:, :n]
    ldj = out[2].reshape(n_pad)[:n]
    return y, ldj


def _reference_forward(x_nc2, rotation, omega):
    """Pure-JAX reference, written literally in angle form (as in PyTorch)."""
    phi_in = jnp.mod(jnp.arctan2(x_nc2[:, 1], x_nc2[:, 0]), TWO_PI)[:, None]   # as_angle
    v = jnp.stack([jnp.cos(phi_in[:, 0]), jnp.sin(phi_in[:, 0])], axis=-1)
    d = v - omega[None, :]
    denom = jnp.sum(d * d, axis=-1, keepdims=True)
    scale = (1.0 - jnp.sum(omega * omega)) / denom
    h = scale * d - omega[None, :]
    phi_out = jnp.mod(jnp.arctan2(h[:, 1], h[:, 0]), TWO_PI)[:, None]          # transform
    dydx = scale                                                               # (N, 1)
    ang = jnp.mod(phi_out + rotation[0], TWO_PI)                               # mod_2pi(phi + theta)
    y = jnp.concatenate([jnp.cos(ang), jnp.sin(ang)], axis=-1)                 # as_vector
    ldj = jnp.log(dydx)[:, 0]                                                  # squeeze(dim=1)
    return y, ldj


if __name__ == "__main__":
    key = jax.random.PRNGKey(0)
    k_ang, k_rot = jax.random.split(key)

    N = 256  # multiple of 128 -> fast path, zero pad/crop copies
    angles = jax.random.uniform(k_ang, (N,), minval=0.0, maxval=TWO_PI)
    # Component-major layout end to end (row 0 = x[:,0], row 1 = x[:,1] of the (N,2) tensor).
    x = jnp.stack([jnp.cos(angles), jnp.sin(angles)]).astype(jnp.float32)

    # nn.Parameter(torch.empty(1).uniform_(0, 2*pi)) -> deterministic rotation angle.
    rotation = jax.random.uniform(
        k_rot, (1,), minval=0.0, maxval=TWO_PI
    ).astype(jnp.float32)
    # Deterministic Moebius parameter for the (unspecified) CircularTransformModule, |omega| < 1.
    omega = jnp.array([0.25, -0.35], dtype=jnp.float32)

    y, ldj = circular_flow_forward(x, rotation, omega)
    jax.block_until_ready((y, ldj))

    x_nc2 = x.T
    y_ref, ldj_ref = _reference_forward(x_nc2, rotation, omega)
    assert y.shape == (2, N) and ldj.shape == (N,)
    assert jnp.allclose(y[0], y_ref[:, 0], atol=1e-5), "y[:,0] mismatch vs reference"
    assert jnp.allclose(y[1], y_ref[:, 1], atol=1e-5), "y[:,1] mismatch vs reference"
    assert jnp.allclose(ldj, ldj_ref, atol=1e-5), "ldj mismatch vs reference"

    print("KERNEL_OK")
</pallas_src>

<mosaic_0001>
module attributes {stable_mosaic.version = 11 : i64} {
  func.func @_circular_flow_kernel(%arg0: i32, %arg1: memref<6xf32, #tpu.memory_space<smem>>, %arg2: memref<2x2x128xf32, #tpu.memory_space<vmem>>, %arg3: memref<3x2x128xf32, #tpu.memory_space<vmem>>) attributes {dimension_semantics = [#tpu.dimension_semantics<parallel>], iteration_bounds = array<i64: 1>, scalar_prefetch = 1 : i64, scratch_operands = 0 : i64, tpu.core_type = #tpu.core_type<tc>, window_params = [{transform_indices = @transform_0, window_bounds = array<i64: 2, 2, 128>}, {transform_indices = @transform_1, window_bounds = array<i64: 3, 2, 128>}]} {
    %c0 = arith.constant 0 : index
    %0 = memref.load %arg1[%c0] : memref<6xf32, #tpu.memory_space<smem>>
    %c1 = arith.constant 1 : index
    %1 = memref.load %arg1[%c1] : memref<6xf32, #tpu.memory_space<smem>>
    %c2 = arith.constant 2 : index
    %2 = memref.load %arg1[%c2] : memref<6xf32, #tpu.memory_space<smem>>
    %c3 = arith.constant 3 : index
    %3 = memref.load %arg1[%c3] : memref<6xf32, #tpu.memory_space<smem>>
    %c4 = arith.constant 4 : index
    %4 = memref.load %arg1[%c4] : memref<6xf32, #tpu.memory_space<smem>>
    %c5 = arith.constant 5 : index
    %5 = memref.load %arg1[%c5] : memref<6xf32, #tpu.memory_space<smem>>
    %c0_0 = arith.constant 0 : index
    %c0_1 = arith.constant 0 : index
    %c0_2 = arith.constant 0 : index
    %6 = vector.load %arg2[%c0_0, %c0_1, %c0_2] : memref<2x2x128xf32, #tpu.memory_space<vmem>>, vector<1x2x128xf32>
    %7 = vector.shape_cast %6 : vector<1x2x128xf32> to vector<2x128xf32>
    %c1_3 = arith.constant 1 : index
    %c0_4 = arith.constant 0 : index
    %c0_5 = arith.constant 0 : index
    %8 = vector.load %arg2[%c1_3, %c0_4, %c0_5] : memref<2x2x128xf32, #tpu.memory_space<vmem>>, vector<1x2x128xf32>
    %9 = vector.shape_cast %8 : vector<1x2x128xf32> to vector<2x128xf32>
    %10 = vector.broadcast %0 : f32 to vector<2x128xf32>
    %11 = arith.subf %7, %10 : vector<2x128xf32>
    %12 = vector.broadcast %1 : f32 to vector<2x128xf32>
    %13 = arith.subf %9, %12 : vector<2x128xf32>
    %14 = arith.mulf %11, %11 : vector<2x128xf32>
    %15 = arith.mulf %13, %13 : vector<2x128xf32>
    %16 = arith.addf %14, %15 : vector<2x128xf32>
    %17 = vector.broadcast %2 : f32 to vector<2x128xf32>
    %18 = arith.divf %17, %16 : vector<2x128xf32>
    %19 = arith.mulf %18, %11 : vector<2x128xf32>
    %20 = vector.broadcast %0 : f32 to vector<2x128xf32>
    %21 = arith.subf %19, %20 : vector<2x128xf32>
    %22 = arith.mulf %18, %13 : vector<2x128xf32>
    %23 = vector.broadcast %1 : f32 to vector<2x128xf32>
    %24 = arith.subf %22, %23 : vector<2x128xf32>
    %25 = vector.broadcast %4 : f32 to vector<2x128xf32>
    %26 = arith.mulf %25, %21 : vector<2x128xf32>
    %27 = vector.broadcast %5 : f32 to vector<2x128xf32>
    %28 = arith.mulf %27, %24 : vector<2x128xf32>
    %29 = arith.subf %26, %28 : vector<2x128xf32>
    %c0_6 = arith.constant 0 : index
    %c0_7 = arith.constant 0 : index
    %c0_8 = arith.constant 0 : index
    %30 = vector.load %arg3[%c0_6, %c0_7, %c0_8] : memref<3x2x128xf32, #tpu.memory_space<vmem>>, vector<1x2x128xf32>
    %31 = vector.shape_cast %30 : vector<1x2x128xf32> to vector<2x128xf32>
    %32 = vector.shape_cast %29 : vector<2x128xf32> to vector<1x2x128xf32>
    tpu.vector_store %arg3[%c0_6, %c0_7, %c0_8], %32 {strides = array<i32>} : memref<3x2x128xf32, #tpu.memory_space<vmem>>, vector<1x2x128xf32>,
    %33 = vector.broadcast %5 : f32 to vector<2x128xf32>
    %34 = arith.mulf %33, %21 : vector<2x128xf32>
    %35 = vector.broadcast %4 : f32 to vector<2x128xf32>
    %36 = arith.mulf %35, %24 : vector<2x128xf32>
    %37 = arith.addf %34, %36 : vector<2x128xf32>
    %c1_9 = arith.constant 1 : index
    %c0_10 = arith.constant 0 : index
    %c0_11 = arith.constant 0 : index
    %38 = vector.load %arg3[%c1_9, %c0_10, %c0_11] : memref<3x2x128xf32, #tpu.memory_space<vmem>>, vector<1x2x128xf32>
    %39 = vector.shape_cast %38 : vector<1x2x128xf32> to vector<2x128xf32>
    %40 = vector.shape_cast %37 : vector<2x128xf32> to vector<1x2x128xf32>
    tpu.vector_store %arg3[%c1_9, %c0_10, %c0_11], %40 {strides = array<i32>} : memref<3x2x128xf32, #tpu.memory_space<vmem>>, vector<1x2x128xf32>,
    %41 = math.log %16 : vector<2x128xf32>
    %42 = vector.broadcast %3 : f32 to vector<2x128xf32>
    %43 = arith.subf %42, %41 : vector<2x128xf32>
    %c2_12 = arith.constant 2 : index
    %c0_13 = arith.constant 0 : index
    %c0_14 = arith.constant 0 : index
    %44 = vector.load %arg3[%c2_12, %c0_13, %c0_14] : memref<3x2x128xf32, #tpu.memory_space<vmem>>, vector<1x2x128xf32>
    %45 = vector.shape_cast %44 : vector<1x2x128xf32> to vector<2x128xf32>
    %46 = vector.shape_cast %43 : vector<2x128xf32> to vector<1x2x128xf32>
    tpu.vector_store %arg3[%c2_12, %c0_13, %c0_14], %46 {strides = array<i32>} : memref<3x2x128xf32, #tpu.memory_space<vmem>>, vector<1x2x128xf32>,
    return
  }
  func.func @transform_0(%arg0: i32, %arg1: memref<6xf32, #tpu.memory_space<smem>>) -> (i32, i32, i32) {
    %c0_i32 = arith.constant 0 : i32
    %c0_i32_0 = arith.constant 0 : i32
    %c0_i32_1 = arith.constant 0 : i32
    return %c0_i32, %arg0, %c0_i32_0 : i32, i32, i32
  }
  func.func @transform_1(%arg0: i32, %arg1: memref<6xf32, #tpu.memory_space<smem>>) -> (i32, i32, i32) {
    %c0_i32 = arith.constant 0 : i32
    %c0_i32_0 = arith.constant 0 : i32
    %c0_i32_1 = arith.constant 0 : i32
    return %c0_i32, %arg0, %c0_i32_0 : i32, i32, i32
  }
}

</mosaic_0001>

<llo_original>
// kernel: tpu_custom_call.1
$region0: #{tpu_custom_call.1}
  #allocation0 [shape = 'u32[]', space=smem, size = 0x4, offset = 0x4, fixed_abs, tag = 'smem constant byte address 0x4 - core index']
  #allocation1 [shape = 'u32[144,128]{1,0:T(1,128)}', space=vmem, size = 0x12000, scoped, tag = 'internal scratch']
  #allocation2 [shape = 's32[1]{0}', space=sflag, size = 0x4, scoped, tag = 'scoped memory for tpu_custom_call.1']
  #allocation3 [shape = 'u8[512]{0}', space=smem, size = 0x200, scoped, tag = 'prefetched SMEM operand 0']
  %s0 = inlined_call_operand.hbm [shape: f32[6], index: 0, kind: input, shape index: {}]
  %s1 = inlined_call_operand.hbm [shape: f32[2,2,128], index: 1, kind: input, shape index: {}]
  %s2 = inlined_call_operand.hbm [shape: f32[3,2,128], index: 2, kind: output, shape index: {}]
  %s3 = sld [smem:[#allocation0]]
  $region18: #{tpu_custom_call.1} parent=0
    _
  %s5 = ssub.s32 1, %s3
  %s6 = scalar_select 0, %s5, %s3
  %8 = dma.hbm_to_smem %s0, 16, [#allocation3], [#allocation2]
  %9 = dma.done [#allocation2], 16
  %10 = sfence
  $region1: #{tpu_custom_call.1} parent=0
    #allocation4 [shape = 'u8[2048]{0}', space=vmem, size = 0x800, scoped, tag = 'input window, operand 1, single buffered']
    #allocation5 [shape = 's32[1]{0}', space=sflag, size = 0x4, scoped, tag = 'scoped memory for tpu_custom_call.1']
    #allocation6 [shape = 's32[1]{0}', space=sflag, size = 0x4, scoped, tag = 'scoped memory for tpu_custom_call.1']
    #allocation7 [shape = 'u8[3072]{0}', space=vmem, size = 0xc00, scoped, tag = 'output window, operand 0, single buffered']
    %11 = vsyncpa [#allocation5], 0
    %12 = vsyncpa [#allocation6], 0
    // Predicated region
    $region2: #{tpu_custom_call.1} parent=1 // pred_check
      _
    $region3: #{tpu_custom_call.1} parent=1 // pred_check_branch
      %14 = sbr.rel (0) target = $region5
    $region4: #{tpu_custom_call.1} parent=1 // pred_region
      %s16 = ssub.s32 64, 64
      %17 = vsyncadd [#allocation5], %s16
      %s18 = sshll.u32 [#allocation4], 4
      %s19 = int_to_ptr.vmem [resolvable:$true] %s18
      %24 = dma.hbm_to_vmem [thread:$0]  %s1, 64, %s19, [#allocation5], 32, 32, 2
    $region5: #{tpu_custom_call.1} parent=1 // pred_fallthru
      _
    // Predicated region
    $region6: #{tpu_custom_call.1} parent=1 // pred_check
      _
    $region7: #{tpu_custom_call.1} parent=1 // pred_check_branch
      %26 = sbr.rel (0) target = $region9
    $region8: #{tpu_custom_call.1} parent=1 // pred_region
      %27 = dma.done [#allocation5], 64
    $region9: #{tpu_custom_call.1} parent=1 // pred_fallthru
      _
    %s28 = sld [smem:[#allocation3]]
    %s29 = sld [smem:[#allocation3 + $0x1]]
    %s30 = sld [smem:[#allocation3 + $0x2]]
    %s31 = sld [smem:[#allocation3 + $0x3]]
    %s32 = sld [smem:[#allocation3 + $0x4]]
    %s33 = sld [smem:[#allocation3 + $0x5]]
    %v34 = vld [vmem:[#allocation4] sm:$0x3]
    %s35 = scalar_lea.vmem [#allocation4], 2
    %v36 = vld [vmem:[%s35] sm:$0x3]
    %v37 = vstv %s28
    %v38 = vsub.f32 %v34, %v37
    %v39 = vstv %s29
    %v40 = vsub.f32 %v36, %v39
    %v41 = vmul.f32 %v38, %v38
    %v42 = vmul.f32 %v40, %v40
    %v43 = vadd.f32 %v41, %v42
    %v44 = vstv %s30
    %v45 = vrcp.pop %v43
    %v46 = vmul.f32 %v44, %v45
    %v47 = vmul.f32 %v46, %v38
    %v48 = vsub.f32 %v47, %v37
    %v49 = vmul.f32 %v46, %v40
    %v50 = vsub.f32 %v49, %v39
    %v51 = vstv %s32
    %v52 = vmul.f32 %v51, %v48
    %v53 = vstv %s33
    %v54 = vmul.f32 %v53, %v50
    %v55 = vsub.f32 %v52, %v54
    %56 = vst [vmem:[#allocation7] sm:$0x3] %v55
    %v57 = vmul.f32 %v53, %v48
    %v58 = vmul.f32 %v51, %v50
    %v59 = vadd.f32 %v57, %v58
    %s60 = scalar_lea.vmem [#allocation7], 2
    %61 = vst [vmem:[%s60] sm:$0x3] %v59
    %v62 = vlog2.pop %v43
    %v63 = vmul.f32 %v62, 0.6931472
    %v64 = vstv %s31
    %v65 = vsub.f32 %v64, %v63
    %s66 = scalar_lea.vmem [#allocation7], 4
    %67 = vst [vmem:[%s66] sm:$0x3] %v65
    // Predicated region
    $region10: #{tpu_custom_call.1} parent=1 // pred_check
      _
    $region11: #{tpu_custom_call.1} parent=1 // pred_check_branch
      %69 = sbr.rel (0) target = $region13
    $region12: #{tpu_custom_call.1} parent=1 // pred_region
      %s71 = ssub.s32 96, 96
      %72 = vsyncadd [#allocation6], %s71
      %s73 = sshll.u32 [#allocation7], 4
      %s74 = int_to_ptr.vmem [resolvable:$true] %s73
      %79 = dma.vmem_to_hbm [thread:$0]  %s74, 96, %s2, [#allocation6], 32, 32, 2
    $region13: #{tpu_custom_call.1} parent=1 // pred_fallthru
      _
    // Predicated region
    $region14: #{tpu_custom_call.1} parent=1 // pred_check
      _
    $region15: #{tpu_custom_call.1} parent=1 // pred_check_branch
      %81 = sbr.rel (0) target = $region17
    $region16: #{tpu_custom_call.1} parent=1 // pred_region
      %82 = dma.done [#allocation6], 96
    $region17: #{tpu_custom_call.1} parent=1 // pred_fallthru
      _
    %83 = vsyncpa [#allocation5], 1
    %84 = vsyncpa [#allocation6], 1

</llo_original>
